<compile_context>
chip_gen: v5e
topology: v5e:2x2
jax: 0.10.0
libtpu: 0.0.40
codegen_flags: <defaults>
</compile_context>

<pallas_src>
import numpy as np
import jax
import jax.numpy as jnp
from jax import lax
from jax.experimental import pallas as pl
from jax.experimental.pallas import tpu as pltpu


# ---------------------------------------------------------------------------
# Kernel A: fused fc1 + (w_k | w_v) projection on the N centre points.
#   kv = features @ (w1 @ [wk | wv]) + b1 @ [wk | wv]
# One wide MXU pass; gathering happens later (K-fold less matmul work than
# projecting the gathered neighbour tensor).
# ---------------------------------------------------------------------------
def kv_proj_kernel(feat_ref, w_ref, b_ref, kv_ref):
    kv_ref[0] = (
        jnp.dot(feat_ref[0], w_ref[...], preferred_element_type=jnp.float32)
        + b_ref[...]
    ).astype(kv_ref.dtype)


# ---------------------------------------------------------------------------
# Kernel B: fused fc1+w_q projection, neighbour gather, fc_delta MLP, fc_gamma
# MLP (softmax scale pre-folded), softmax over neighbours, weighted reduction,
# fc2 + residual.  One (batch, N-tile) block per grid step.
# ---------------------------------------------------------------------------
def _make_attention_kernel(kk, dm, in_kernel_gather, dense_attn):
    def kernel(*refs):
        if in_kernel_gather:
            feat_ref, kv_ref, idx_ref, rel_ref = refs[:4]
        else:
            feat_ref, kg_ref, vg_ref, rel_ref = refs[:4]
        w_refs = refs[4:16]
        out_ref, attn_ref = refs[16], refs[17]
        (wq_ref, bq_ref, wd1_ref, bd1_ref, wd2_ref, bd2_ref,
         wg1_ref, bg1_ref, wg2_ref, bg2_ref, w2_ref, b2_ref) = w_refs

        feats = feat_ref[0]                                   # (tn, dp)
        tn = feats.shape[0]

        # fc1 folded into w_q in the wrapper (exact): q = feats @ (w1@wq) + b1@wq
        q = (jnp.dot(feats, wq_ref[...], preferred_element_type=jnp.float32)
             + bq_ref[...])                                   # (tn, dm)

        if in_kernel_gather:
            idx = idx_ref[0, 0]                               # (tn*K,) int32, lane-major
            kvg = jnp.take(kv_ref[0], idx, axis=0,
                           mode=lax.GatherScatterMode.PROMISE_IN_BOUNDS)
            kf = kvg[:, :dm]                                  # (tn*K, dm)
            vf = kvg[:, dm:2 * dm]
        else:
            kf = kg_ref[0]                                    # (tn*K, dm)
            vf = vg_ref[0]

        # fc_delta positional MLP (rel xyz zero-padded 3 -> 8 lanes; exact).
        rel = rel_ref[0]                                      # (tn*K, 8)
        ph = jnp.dot(rel, wd1_ref[...], preferred_element_type=jnp.float32) + bd1_ref[...]
        ph = jnp.maximum(ph, 0.0)
        pos = jnp.dot(ph, wd2_ref[...], preferred_element_type=jnp.float32) + bd2_ref[...]

        # NOTE: the (tn*K, dm) <-> (tn, K, dm) regroupings keep the minor dim
        # unchanged and are layout-free because K == 8 == the f32 sublane count.
        k3 = kf.reshape(tn, kk, dm)
        v3 = vf.reshape(tn, kk, dm)
        pos3 = pos.reshape(tn, kk, dm)

        # fc_gamma(q - k + pos_enc); 1/sqrt(dm) folded into wg2/bg2 (exact).
        t = (q[:, None, :] - k3 + pos3).reshape(tn * kk, dm)
        gh = jnp.dot(t, wg1_ref[...], preferred_element_type=jnp.float32) + bg1_ref[...]
        gh = jnp.maximum(gh, 0.0)
        g = jnp.dot(gh, wg2_ref[...], preferred_element_type=jnp.float32) + bg2_ref[...]
        logits = g.reshape(tn, kk, dm)

        # softmax over the neighbour axis (torch dim=-2 -> axis 1 here).
        m = jnp.max(logits, axis=1, keepdims=True)
        e = jnp.exp(logits - m)
        denom = jnp.sum(e, axis=1)                            # (tn, dm)
        inv = pl.reciprocal(denom, approx=True)               # EUP slot, ~free
        attn = e * inv[:, None, :]                            # (tn, K, dm)

        # res = einsum('mnf,mnf->mf', attn, v + pos_enc); then fc2 + residual.
        res = jnp.sum(attn * (v3 + pos3), axis=1)             # (tn, dm)
        out = (jnp.dot(res, w2_ref[...], preferred_element_type=jnp.float32)
               + b2_ref[...] + feats)

        out_ref[0] = out.astype(out_ref.dtype)
        if dense_attn:
            # Lane-dense (tn, K*dm) store (unmasked vst on the largest output);
            # the wrapper reshapes back to (B, N, K, dm).
            attn_ref[0] = attn.reshape(tn, kk * dm).astype(attn_ref.dtype)
        else:
            attn_ref[0] = attn.astype(attn_ref.dtype)

    return kernel


def _gather_rows(points, idx):
    """index_points: points (B, N, C), idx (B, ...) -> (B, ..., C)."""
    return jax.vmap(lambda p, i: p[i])(points, idx)


def _choose_tile(n, batch, k, target=512):
    """Largest N-tile <= target dividing n; tn*K stays 128-lane aligned when
    tiling so the flattened knn-index block is a legal BlockSpec."""
    def ok(t):
        return n % t == 0 and t % 8 == 0 and (t * k) % 128 == 0

    tn = n
    if n > target:
        for t in range(target, 7, -1):
            if ok(t):
                tn = t
                break
    # v7x megacore: make sure there are >= 2 grid steps when possible so both
    # TensorCores get work.
    if batch * (n // tn) < 2:
        for t in range(tn // 2, 7, -1):
            if ok(t):
                tn = t
                break
    # TODO(synk): pad N / mask a ragged last tile instead of falling back to
    # tn == n when n has no suitable divisor (keeps VMEM bounded for awkward N).
    return tn


_ATTN_CONFIG = [None]  # cached (in_kernel_gather, dense_attn) that lowered OK


def transformer_block(xyz, features, params, k):
    B, N, _ = xyz.shape
    dp = features.shape[-1]
    dm = params["w1"].shape[1]
    f32 = jnp.float32

    # ---- KNN glue (plain JAX) ----------------------------------------------
    # TODO(synk): the O(N^2) pairwise distances + top_k stay in XLA; a tiled
    # top-k is needed to avoid the (B, N, N) matrix at large point counts.
    diff = xyz[:, :, None, :] - xyz[:, None, :, :]
    dists = jnp.sum(diff * diff, axis=-1)                    # (B, N, N)
    _, knn_idx = lax.top_k(-dists, k)                        # (B, N, K), ascending dist
    knn_idx = knn_idx.astype(jnp.int32)
    knn_xyz = _gather_rows(xyz, knn_idx)                     # (B, N, K, 3)
    rel = xyz[:, :, None, :] - knn_xyz                       # (B, N, K, 3)
    rel_pad = jnp.pad(rel.reshape(B, N * k, 3), ((0, 0), (0, 0), (0, 5)))  # (B, N*K, 8)
    knn_flat = knn_idx.reshape(B, 1, N * k)                  # lane-major index block

    # ---- exact weight folding ----------------------------------------------
    w_kv = jnp.concatenate([params["w1"] @ params["wk"],
                            params["w1"] @ params["wv"]], axis=1)    # (dp, 2*dm)
    b_kv = jnp.concatenate([params["b1"] @ params["wk"],
                            params["b1"] @ params["wv"]], axis=1)    # (1, 2*dm)
    w_q = params["w1"] @ params["wq"]                                # (dp, dm)
    b_q = params["b1"] @ params["wq"]                                # (1, dm)
    wd1_pad = jnp.pad(params["wd1"], ((0, 5), (0, 0)))               # (8, dm)
    inv_sqrt = jnp.float32(1.0 / np.sqrt(dm))
    wg2_s = params["wg2"] * inv_sqrt                                 # softmax scale folded
    bg2_s = params["bg2"] * inv_sqrt

    tn = _choose_tile(N, B, k)
    grid = (B, N // tn)

    # Scoped-VMEM budget: resident k|v + double-buffered tiles + intermediates.
    # v5e's default scoped VMEM is 16 MiB; clamp to 48 MiB (v7x has 64 MiB/TC).
    per_step = 4 * (2 * N * 2 * dm + 12 * tn * k * dm + 4 * tn * (dp + k))
    vmem_limit = int(min(max(2 * per_step, 32 << 20), 48 << 20))
    cparams = pltpu.CompilerParams(
        dimension_semantics=("parallel", "parallel"),
        vmem_limit_bytes=vmem_limit)

    # ---- Kernel A: fused fc1 + k|v projection on centre points --------------
    kv = pl.pallas_call(
        kv_proj_kernel,
        out_shape=jax.ShapeDtypeStruct((B, N, 2 * dm), f32),
        grid_spec=pltpu.PrefetchScalarGridSpec(
            num_scalar_prefetch=0,
            grid=grid,
            in_specs=[
                pl.BlockSpec((1, tn, dp), lambda b, j: (b, j, 0)),
                pl.BlockSpec(w_kv.shape, lambda b, j: (0, 0)),
                pl.BlockSpec(b_kv.shape, lambda b, j: (0, 0)),
            ],
            out_specs=pl.BlockSpec((1, tn, 2 * dm), lambda b, j: (b, j, 0)),
        ),
        compiler_params=cparams,
    )(features, w_kv, b_kv)

    weights = [w_q, b_q, wd1_pad, params["bd1"], params["wd2"], params["bd2"],
               params["wg1"], params["bg1"], wg2_s, bg2_s,
               params["w2"], params["b2"]]
    w_specs = [pl.BlockSpec(w.shape, lambda b, j: (0, 0)) for w in weights]
    feat_spec = pl.BlockSpec((1, tn, dp), lambda b, j: (b, j, 0))
    rel_spec = pl.BlockSpec((1, tn * k, 8), lambda b, j: (b, j, 0))
    out_spec = pl.BlockSpec((1, tn, dp), lambda b, j: (b, j, 0))
    out_shape_res = jax.ShapeDtypeStruct((B, N, dp), f32)

    def _run(in_kernel_gather, dense_attn):
        if in_kernel_gather:
            # k|v stay resident per batch (constant block index over the N-tile
            # axis); the K neighbours are gathered in-kernel from VMEM, so the
            # 8x-amplified gathered tensors never touch HBM.
            ins = (features, kv, knn_flat, rel_pad)
            in_specs = [
                feat_spec,
                pl.BlockSpec((1, N, 2 * dm), lambda b, j: (b, 0, 0)),
                pl.BlockSpec((1, 1, tn * k), lambda b, j: (b, 0, j)),
                rel_spec,
            ]
        else:
            # Conservative fallback: XLA-side gather of the projected k|v
            # (mirrors the previously validated structure).
            kx = kv[..., :dm]
            vx = kv[..., dm:]
            kg = _gather_rows(kx, knn_idx).reshape(B, N * k, dm)
            vg = _gather_rows(vx, knn_idx).reshape(B, N * k, dm)
            ins = (features, kg, vg, rel_pad)
            in_specs = [
                feat_spec,
                pl.BlockSpec((1, tn * k, dm), lambda b, j: (b, j, 0)),
                pl.BlockSpec((1, tn * k, dm), lambda b, j: (b, j, 0)),
                rel_spec,
            ]
        if dense_attn:
            attn_shape = jax.ShapeDtypeStruct((B, N, k * dm), f32)
            attn_spec = pl.BlockSpec((1, tn, k * dm), lambda b, j: (b, j, 0))
        else:
            attn_shape = jax.ShapeDtypeStruct((B, N, k, dm), f32)
            attn_spec = pl.BlockSpec((1, tn, k, dm), lambda b, j: (b, j, 0, 0))

        kernel = _make_attention_kernel(k, dm, in_kernel_gather, dense_attn)
        res, attn = pl.pallas_call(
            kernel,
            out_shape=(out_shape_res, attn_shape),
            grid_spec=pltpu.PrefetchScalarGridSpec(
                num_scalar_prefetch=0,
                grid=grid,
                in_specs=in_specs + w_specs,
                out_specs=(out_spec, attn_spec),
            ),
            compiler_params=cparams,
        )(*ins, *weights)
        res = jax.block_until_ready(res)
        attn = jax.block_until_ready(attn)
        if dense_attn:
            attn = attn.reshape(B, N, k, dm)
        return res, attn

    # Prefer the fully optimized configuration; degrade gracefully (and cache
    # the winning config) if in-kernel gather / lane-dense relayout does not
    # lower on this jax/libtpu stack.
    if _ATTN_CONFIG[0] is not None:
        configs = (_ATTN_CONFIG[0],)
    else:
        configs = ((True, True), (True, False), (False, False))
    last_err = None
    for cfg in configs:
        try:
            out = _run(*cfg)
            _ATTN_CONFIG[0] = cfg
            return out
        except Exception as e:  # Mosaic lowering not supported for this config
            last_err = e
    raise last_err


def reference(xyz, features, params, k):
    """Pure-JAX reference following the PyTorch forward op-for-op (unfused)."""
    dm = params["w1"].shape[1]
    diff = xyz[:, :, None, :] - xyz[:, None, :, :]
    dists = jnp.sum(diff * diff, axis=-1)
    knn_idx = jnp.argsort(dists, axis=-1)[:, :, :k]
    knn_xyz = _gather_rows(xyz, knn_idx)

    pre = features
    x = features @ params["w1"] + params["b1"]
    q = x @ params["wq"]
    kx = x @ params["wk"]
    vx = x @ params["wv"]
    kg = _gather_rows(kx, knn_idx)                            # (B, N, K, dm)
    vg = _gather_rows(vx, knn_idx)

    rel = xyz[:, :, None, :] - knn_xyz
    ph = jnp.maximum(rel @ params["wd1"] + params["bd1"], 0.0)
    pos = ph @ params["wd2"] + params["bd2"]

    t = q[:, :, None, :] - kg + pos
    gh = jnp.maximum(t @ params["wg1"] + params["bg1"], 0.0)
    g = gh @ params["wg2"] + params["bg2"]
    attn = jax.nn.softmax(g / np.sqrt(dm), axis=-2)
    res = jnp.einsum("bmnf,bmnf->bmf", attn, vg + pos)
    res = res @ params["w2"] + params["b2"] + pre
    return res, attn


def init_params(key, d_points, d_model):
    keys = jax.random.split(key, 20)
    it = iter(keys)

    def lin_w(fan_in, fan_out):
        bound = 1.0 / np.sqrt(fan_in)
        return jax.random.uniform(next(it), (fan_in, fan_out), jnp.float32, -bound, bound)

    def lin_b(fan_in, fan_out):
        bound = 1.0 / np.sqrt(fan_in)
        return jax.random.uniform(next(it), (1, fan_out), jnp.float32, -bound, bound)

    p = {}
    p["w1"], p["b1"] = lin_w(d_points, d_model), lin_b(d_points, d_model)
    p["wq"] = lin_w(d_model, d_model)
    p["wk"] = lin_w(d_model, d_model)
    p["wv"] = lin_w(d_model, d_model)
    p["wd1"], p["bd1"] = lin_w(3, d_model), lin_b(3, d_model)
    p["wd2"], p["bd2"] = lin_w(d_model, d_model), lin_b(d_model, d_model)
    p["wg1"], p["bg1"] = lin_w(d_model, d_model), lin_b(d_model, d_model)
    p["wg2"], p["bg2"] = lin_w(d_model, d_model), lin_b(d_model, d_model)
    p["w2"], p["b2"] = lin_w(d_model, d_points), lin_b(d_model, d_points)
    return p


if __name__ == "__main__":
    B, N, K = 2, 16, 8
    d_points, d_model = 32, 32

    key = jax.random.PRNGKey(0)
    kx_, kf_, kp_ = jax.random.split(key, 3)
    xyz = jax.random.normal(kx_, (B, N, 3), jnp.float32)
    features = jax.random.normal(kf_, (B, N, d_points), jnp.float32)
    params = init_params(kp_, d_points, d_model)

    res, attn = transformer_block(xyz, features, params, K)
    res = jax.block_until_ready(res)
    attn = jax.block_until_ready(attn)

    res_ref, attn_ref = reference(xyz, features, params, K)
    assert res.shape == (B, N, d_points)
    assert attn.shape == (B, N, K, d_model)
    # Tolerances loosened slightly for the approx (EUP) reciprocal in softmax
    # and the exact-algebra weight foldings (different rounding order).
    np.testing.assert_allclose(np.asarray(res), np.asarray(res_ref), rtol=1e-2, atol=1e-3)
    np.testing.assert_allclose(np.asarray(attn), np.asarray(attn_ref), rtol=1e-2, atol=1e-3)

    print("KERNEL_OK")
</pallas_src>

<mosaic_0001>
module attributes {stable_mosaic.version = 11 : i64} {
  func.func @kv_proj_kernel(%arg0: i32, %arg1: i32, %arg2: memref<1x16x32xf32, #tpu.memory_space<vmem>>, %arg3: memref<32x64xf32, #tpu.memory_space<vmem>>, %arg4: memref<1x64xf32, #tpu.memory_space<vmem>>, %arg5: memref<1x16x64xf32, #tpu.memory_space<vmem>>) attributes {dimension_semantics = [#tpu.dimension_semantics<parallel>, #tpu.dimension_semantics<parallel>], iteration_bounds = array<i64: 2, 1>, scalar_prefetch = 0 : i64, scratch_operands = 0 : i64, tpu.core_type = #tpu.core_type<tc>, window_params = [{transform_indices = @transform_0, window_bounds = array<i64: 1, 16, 32>}, {pipeline_mode = #tpu.pipeline_mode<synchronous>, transform_indices = @transform_1, window_bounds = array<i64: 32, 64>}, {pipeline_mode = #tpu.pipeline_mode<synchronous>, transform_indices = @transform_2, window_bounds = array<i64: 1, 64>}, {transform_indices = @transform_3, window_bounds = array<i64: 1, 16, 64>}]} {
    %c0 = arith.constant 0 : index
    %c0_0 = arith.constant 0 : index
    %c0_1 = arith.constant 0 : index
    %0 = vector.load %arg2[%c0, %c0_0, %c0_1] : memref<1x16x32xf32, #tpu.memory_space<vmem>>, vector<1x16x32xf32>
    %1 = vector.shape_cast %0 : vector<1x16x32xf32> to vector<16x32xf32>
    %c0_2 = arith.constant 0 : index
    %c0_3 = arith.constant 0 : index
    %2 = vector.load %arg3[%c0_2, %c0_3] : memref<32x64xf32, #tpu.memory_space<vmem>>, vector<32x64xf32>
    %cst = arith.constant dense<0.000000e+00> : vector<16x64xf32>
    %3 = tpu.matmul %1, %2, %cst {dimension_numbers = #tpu.dot_dimension_numbers<[1], [0], [0], [1], [0, 0, 1, 1], [], []>} : vector<16x32xf32>, vector<32x64xf32>, vector<16x64xf32> -> vector<16x64xf32>
    %c0_4 = arith.constant 0 : index
    %c0_5 = arith.constant 0 : index
    %4 = vector.load %arg4[%c0_4, %c0_5] : memref<1x64xf32, #tpu.memory_space<vmem>>, vector<1x64xf32>
    %5 = vector.broadcast %4 : vector<1x64xf32> to vector<16x64xf32>
    %6 = arith.addf %3, %5 : vector<16x64xf32>
    %c0_6 = arith.constant 0 : index
    %c0_7 = arith.constant 0 : index
    %c0_8 = arith.constant 0 : index
    %7 = vector.load %arg5[%c0_6, %c0_7, %c0_8] : memref<1x16x64xf32, #tpu.memory_space<vmem>>, vector<1x16x64xf32>
    %8 = vector.shape_cast %7 : vector<1x16x64xf32> to vector<16x64xf32>
    %9 = vector.shape_cast %6 : vector<16x64xf32> to vector<1x16x64xf32>
    tpu.vector_store %arg5[%c0_6, %c0_7, %c0_8], %9 {strides = array<i32>} : memref<1x16x64xf32, #tpu.memory_space<vmem>>, vector<1x16x64xf32>,
    return
  }
  func.func @transform_0(%arg0: i32, %arg1: i32) -> (i32, i32, i32) {
    %c0_i32 = arith.constant 0 : i32
    %c0_i32_0 = arith.constant 0 : i32
    return %arg0, %arg1, %c0_i32 : i32, i32, i32
  }
  func.func @transform_1(%arg0: i32, %arg1: i32) -> (i32, i32) {
    %c0_i32 = arith.constant 0 : i32
    %c0_i32_0 = arith.constant 0 : i32
    %c0_i32_1 = arith.constant 0 : i32
    return %c0_i32, %c0_i32_0 : i32, i32
  }
  func.func @transform_2(%arg0: i32, %arg1: i32) -> (i32, i32) {
    %c0_i32 = arith.constant 0 : i32
    %c0_i32_0 = arith.constant 0 : i32
    %c0_i32_1 = arith.constant 0 : i32
    return %c0_i32, %c0_i32_0 : i32, i32
  }
  func.func @transform_3(%arg0: i32, %arg1: i32) -> (i32, i32, i32) {
    %c0_i32 = arith.constant 0 : i32
    %c0_i32_0 = arith.constant 0 : i32
    return %arg0, %arg1, %c0_i32 : i32, i32, i32
  }
}

</mosaic_0001>

<llo_original>
// kernel: tpu_custom_call.1
$region0: #{tpu_custom_call.1}
  #allocation0 [shape = 'u32[]', space=smem, size = 0x4, offset = 0x4, fixed_abs, tag = 'smem constant byte address 0x4 - core index']
  #allocation1 [shape = 'u32[72,128]{1,0:T(1,128)}', space=vmem, size = 0x9000, scoped, tag = 'internal scratch']
  %s0 = inlined_call_operand.hbm [shape: f32[2,16,32], index: 0, kind: input, shape index: {}]
  %s1 = inlined_call_operand.hbm [shape: f32[32,64], index: 1, kind: input, shape index: {}]
  %s2 = inlined_call_operand.vmem [shape: f32[1,64], index: 2, kind: input, shape index: {}]
  %s3 = inlined_call_operand.hbm [shape: f32[2,16,64], index: 3, kind: output, shape index: {}]
  %s4 = sld [smem:[#allocation0]]
  $region53: #{tpu_custom_call.1} parent=0
    _
  %s6 = ssub.s32 1, %s4
  %s7 = scalar_select 0, %s6, %s4
  $region1: #{tpu_custom_call.1} parent=0
    #allocation2 [shape = 'u8[16384]{0}', space=vmem, size = 0x4000, scoped, tag = 'input window, operand 0']
    #allocation3 [shape = 's32[2]{0}', space=sflag, size = 0x8, scoped, tag = 'scoped memory for tpu_custom_call.1']
    #allocation4 [shape = 's32[2]{0}', space=sflag, size = 0x8, scoped, tag = 'scoped memory for tpu_custom_call.1']
    #allocation5 [shape = 'u8[16384]{0}', space=vmem, size = 0x4000, scoped, tag = 'input window, operand 1, single buffered']
    #allocation6 [shape = 's32[1]{0}', space=sflag, size = 0x4, scoped, tag = 'scoped memory for tpu_custom_call.1']
    #allocation7 [shape = 'u8[16384]{0}', space=vmem, size = 0x4000, scoped, tag = 'output window, operand 0']
    %8 = vsyncpa [#allocation3], 0
    %s9 = scalar_lea.sflag [#allocation3], 1
    %10 = vsyncpa %s9, 0
    %11 = vsyncpa [#allocation6], 0
    %12 = vsyncpa [#allocation4], 0
    %s13 = scalar_lea.sflag [#allocation4], 1
    %14 = vsyncpa %s13, 0
    loop: start=0, step=1, limit=4
    $region2: #{tpu_custom_call.1} parent=1 // loop_pre_header
      _
    $region3: #{tpu_custom_call.1} parent=1 // loop_header
      %s16 = sphi 0, %s20
      %p17 = scmp.ge.s32.totalorder %s16, 4
      %s23 = sphi 0, %s35
      %s24 = sphi 0, %s31
      %s25 = sphi 0, %s23
      %s26 = sphi 0, %s24
      %s27 = sphi 0, %s25
      %s28 = sphi 0, %s26
      %s40 = sphi 0, %s42
      %s43 = sphi 0, %s40
      %s44 = sphi 0, %s43
      %s60 = sphi 0, %s44
      %s64 = sphi 0, %s64
      %s66 = sphi 0, %s64
      %s67 = sphi 0, %s66
      %s81 = sphi 0, %s67
      %s85 = sphi 0, %s85
      %s87 = sphi 0, %s85
      %s88 = sphi 0, %s87
      %s102 = sphi 0, %s88
      %s110 = sphi 0, %s112
      %s113 = sphi 0, %s110
      %s114 = sphi 0, %s113
      %s130 = sphi 0, %s114
    $region4: #{tpu_custom_call.1} parent=1 // loop_header_branch
      %19 = sbr.rel (%p17) target = $region8
    $region5: #{tpu_custom_call.1} parent=1 // loop_body
      %s21 = ssub.s32 %s16, 1
      %s22 = ssub.s32 %s16, 2
      %s29 = sadd.s32 1, %s24
      %p30 = scmp.ge.s32.totalorder %s29, 1
      %s31 = scalar_select %p30, 0, %s29
      %s32 = sadd.s32 1, %s23
      %s33 = scalar_select %p30, %s32, %s23
      %p34 = scmp.ge.s32.totalorder %s33, 2
      %s35 = scalar_select %p34, 0, %s33
      %s36 = ssub.s32 %s23, %s35
      %s37 = ssub.s32 %s24, %s31
      %s38 = sor.u32 %s36, %s37
      %p39 = scmp.eq.s32.totalorder %s38, 0
      %s41 = sadd.s32 %s40, 1
      %s42 = scalar_select %p39, %s40, %s41
      %p45 = pneg %p39
      %p46 = scmp.eq.s32.totalorder %s16, 1
      %p47 = por %p45, %p46
      %p48 = scmp.ne.s32.totalorder %s40, %s43
      %p49 = scmp.eq.s32.totalorder %s16, 0
      %p50 = por %p48, %p49
      %p51 = scmp.ne.s32.totalorder %s40, %s43
      %p52 = scmp.eq.s32.totalorder %s21, 1
      %p53 = por %p51, %p52
      %p54 = scmp.ne.s32.totalorder %s43, %s44
      %p55 = scmp.eq.s32.totalorder %s21, 0
      %p56 = por %p54, %p55
      %p57 = scmp.ne.s32.totalorder %s43, %s44
      %p58 = scmp.eq.s32.totalorder %s22, 1
      %p59 = por %p57, %p58
      %p61 = scmp.ne.s32.totalorder %s44, %s60
      %p62 = scmp.eq.s32.totalorder %s22, 0
      %p63 = por %p61, %p62
      %s65 = sadd.s32 %s64, 1
      %p68 = scmp.eq.s32.totalorder %s16, 1
      %p69 = scmp.ne.s32.totalorder %s64, %s66
      %p70 = scmp.eq.s32.totalorder %s16, 0
      %p71 = por %p69, %p70
      %p72 = scmp.ne.s32.totalorder %s64, %s66
      %p73 = scmp.eq.s32.totalorder %s21, 1
      %p74 = por %p72, %p73
      %p75 = scmp.ne.s32.totalorder %s66, %s67
      %p76 = scmp.eq.s32.totalorder %s21, 0
      %p77 = por %p75, %p76
      %p78 = scmp.ne.s32.totalorder %s66, %s67
      %p79 = scmp.eq.s32.totalorder %s22, 1
      %p80 = por %p78, %p79
      %p82 = scmp.ne.s32.totalorder %s67, %s81
      %p83 = scmp.eq.s32.totalorder %s22, 0
      %p84 = por %p82, %p83
      %s86 = sadd.s32 %s85, 1
      %p89 = scmp.eq.s32.totalorder %s16, 1
      %p90 = scmp.ne.s32.totalorder %s85, %s87
      %p91 = scmp.eq.s32.totalorder %s16, 0
      %p92 = por %p90, %p91
      %p93 = scmp.ne.s32.totalorder %s85, %s87
      %p94 = scmp.eq.s32.totalorder %s21, 1
      %p95 = por %p93, %p94
      %p96 = scmp.ne.s32.totalorder %s87, %s88
      %p97 = scmp.eq.s32.totalorder %s21, 0
      %p98 = por %p96, %p97
      %p99 = scmp.ne.s32.totalorder %s87, %s88
      %p100 = scmp.eq.s32.totalorder %s22, 1
      %p101 = por %p99, %p100
      %p103 = scmp.ne.s32.totalorder %s88, %s102
      %p104 = scmp.eq.s32.totalorder %s22, 0
      %p105 = por %p103, %p104
      %s106 = ssub.s32 %s23, %s35
      %s107 = ssub.s32 %s24, %s31
      %s108 = sor.u32 %s106, %s107
      %p109 = scmp.eq.s32.totalorder %s108, 0
      %s111 = sadd.s32 %s110, 1
      %s112 = scalar_select %p109, %s110, %s111
      %p115 = pneg %p109
      %p116 = scmp.eq.s32.totalorder %s16, 1
      %p117 = por %p115, %p116
      %p118 = scmp.ne.s32.totalorder %s110, %s113
      %p119 = scmp.eq.s32.totalorder %s16, 0
      %p120 = por %p118, %p119
      %p121 = scmp.ne.s32.totalorder %s110, %s113
      %p122 = scmp.eq.s32.totalorder %s21, 1
      %p123 = por %p121, %p122
      %p124 = scmp.ne.s32.totalorder %s113, %s114
      %p125 = scmp.eq.s32.totalorder %s21, 0
      %p126 = por %p124, %p125
      %p127 = scmp.ne.s32.totalorder %s113, %s114
      %p128 = scmp.eq.s32.totalorder %s22, 1
      %p129 = por %p127, %p128
      %p131 = scmp.ne.s32.totalorder %s114, %s130
      %p132 = scmp.eq.s32.totalorder %s22, 0
      %p133 = por %p131, %p132
      %p134 = scmp.le.s32.totalorder 1, %s16
      %p135 = scmp.lt.s32.totalorder %s16, 3
      %p136 = pnand %p134, %p135
      %p137 = pneg %p136
      // Predicated region
      $region9: #{tpu_custom_call.1} parent=5 // pred_check
        _
      $region10: #{tpu_custom_call.1} parent=5 // pred_check_branch
        %139 = sbr.rel (%p136) target = $region12
      $region11: #{tpu_custom_call.1} parent=5 // pred_region
        %s140 = ssub.s32 %s16, 1
        // Predicated region
        $region13: #{tpu_custom_call.1} parent=11 // pred_check
          %p141 = pneg %p77
        $region14: #{tpu_custom_call.1} parent=11 // pred_check_branch
          %143 = sbr.rel (%p141) target = $region16
        $region15: #{tpu_custom_call.1} parent=11 // pred_region
          %145 = vsyncadd [#allocation6], 0
          %s146 = sshll.u32 %s1, 4
          %s147 = int_to_ptr.hbm [resolvable:$true] %s146
          %s148 = sshll.u32 [#allocation5], 4
          %s149 = int_to_ptr.vmem [resolvable:$true] %s148
          %154 = dma.hbm_to_vmem [thread:$0]  %s147, 512, %s149, [#allocation6], 128, 128, 8
        $region16: #{tpu_custom_call.1} parent=11 // pred_fallthru
          _
        // Predicated region
        $region17: #{tpu_custom_call.1} parent=11 // pred_check
          %p155 = pneg %p98
        $region18: #{tpu_custom_call.1} parent=11 // pred_check_branch
          %157 = sbr.rel (%p155) target = $region20
        $region19: #{tpu_custom_call.1} parent=11 // pred_region
          _
        $region20: #{tpu_custom_call.1} parent=11 // pred_fallthru
          _
      $region12: #{tpu_custom_call.1} parent=5 // pred_fallthru
        _
      %p158 = scmp.lt.s32.totalorder %s16, 2
      // Predicated region
      $region21: #{tpu_custom_call.1} parent=5 // pred_check
        %p159 = pneg %p158
      $region22: #{tpu_custom_call.1} parent=5 // pred_check_branch
        %161 = sbr.rel (%p159) target = $region24
      $region23: #{tpu_custom_call.1} parent=5 // pred_region
        // Predicated region
        $region25: #{tpu_custom_call.1} parent=23 // pred_check
          %p162 = pneg %p50
        $region26: #{tpu_custom_call.1} parent=23 // pred_check_branch
          %164 = sbr.rel (%p162) target = $region28
        $region27: #{tpu_custom_call.1} parent=23 // pred_region
          %s165 = sand.u32 %s40, 1
          %s166 = scalar_lea.sflag [#allocation3], %s165
          %s167 = sand.u32 %s40, 1
          %s168 = smul.addr %s167, 16
          %s169 = scalar_lea.vmem [#allocation2], %s168
          %s170 = smul.u32 2, %s24
          %172 = vsyncadd %s166, 0
          %s173 = smul.addr %s23, 2
          %s174 = sadd.s32 %s170, %s173
          %s175 = smul.addr %s174, 8
          %s176 = scalar_lea.hbm %s0, %s175
          %s177 = sshll.u32 %s176, 4
          %s178 = int_to_ptr.hbm [resolvable:$true] %s177
          %s179 = sshll.u32 %s169, 4
          %s180 = int_to_ptr.vmem [resolvable:$true] %s179
          %185 = dma.hbm_to_vmem [thread:$0]  %s178, 256, %s180, %s166, 128, 128, 8
        $region28: #{tpu_custom_call.1} parent=23 // pred_fallthru
          _
      $region24: #{tpu_custom_call.1} parent=5 // pred_fallthru
        _
      %p186 = scmp.le.s32.totalorder 1, %s16
      %p187 = scmp.lt.s32.totalorder %s16, 3
      %p188 = pnand %p186, %p187
      %p189 = pneg %p188
      // Predicated region
      $region29: #{tpu_custom_call.1} parent=5 // pred_check
        _
      $region30: #{tpu_custom_call.1} parent=5 // pred_check_branch
        %191 = sbr.rel (%p188) target = $region32
      $region31: #{tpu_custom_call.1} parent=5 // pred_region
        %s192 = ssub.s32 %s16, 1
        %s193 = sand.u32 %s43, 1
        %s194 = scalar_lea.sflag [#allocation3], %s193
        %s195 = sand.u32 %s43, 1
        %s196 = smul.addr %s195, 16
        %s197 = scalar_lea.vmem [#allocation2], %s196
        // Predicated region
        $region33: #{tpu_custom_call.1} parent=31 // pred_check
          %p198 = pneg %p56
        $region34: #{tpu_custom_call.1} parent=31 // pred_check_branch
          %200 = sbr.rel (%p198) target = $region36
        $region35: #{tpu_custom_call.1} parent=31 // pred_region
          %202 = dma.done %s194, 256
        $region36: #{tpu_custom_call.1} parent=31 // pred_fallthru
          _
        // Predicated region
        $region37: #{tpu_custom_call.1} parent=31 // pred_check
          %p203 = pneg %p77
        $region38: #{tpu_custom_call.1} parent=31 // pred_check_branch
          %205 = sbr.rel (%p203) target = $region40
        $region39: #{tpu_custom_call.1} parent=31 // pred_region
          %207 = dma.done [#allocation6], 512
        $region40: #{tpu_custom_call.1} parent=31 // pred_fallthru
          _
        %s208 = sand.u32 %s43, 1
        %s209 = scalar_lea.sflag [#allocation3], %s208
        %s210 = sand.u32 %s43, 1
        %s211 = smul.addr %s210, 16
        %s212 = scalar_lea.vmem [#allocation2], %s211
        %p213 = pneg %p56
        %p214 = pneg %p53
        %p215 = pneg %p77
        %p216 = pneg %p74
        %p217 = pneg %p98
        %p218 = pneg %p95
        %p219 = pneg %p126
        %p220 = pneg %p123
        %s221 = sand.u32 %s113, 1
        %s222 = scalar_lea.sflag [#allocation4], %s221
        %s223 = sand.u32 %s113, 1
        %s224 = smul.addr %s223, 16
        %s225 = scalar_lea.vmem [#allocation7], %s224
        %s226 = smul.u32 2, %s26
        %s227 = smul.u32 2, %s26
        %v228 = vld [vmem:[%s197] sm:$0xff]
        %v229 = vld [vmem:[%s197 + $0x8] sm:$0xff]
        %v230 = vld [vmem:[#allocation5] sm:$0xff]
        %v231 = vld [vmem:[#allocation5 + $0x8] sm:$0xff]
        %v232 = vld [vmem:[#allocation5 + $0x10] sm:$0xff]
        %v233 = vld [vmem:[#allocation5 + $0x18] sm:$0xff]
        %v234 = vld [vmem:[%s2] sm:$0x1]
        %v236 = vperm.slane %v234, 0
        %vm238 = vcmask 261120
        %v240 = vsel %vm238, %v228, 0
        %v243 = vsel %vm238, %v229, 0
        %245 = vmatpush.msra.mxu0 0.0
        %246 = vmatpush.msra.mxu0 0.0
        %247 = vmatpush.msra.mxu0 0.0
        %248 = vmatpush.msra.mxu0 0.0
        %249 = vmatpush.msra.mxu0 0.0
        %250 = vmatpush.msra.mxu0 0.0
        %251 = vmatpush.msra.mxu0 0.0
        %252 = vmatpush.msra.mxu0 0.0
        %253 = vmatpush.msra.mxu0 0.0
        %254 = vmatpush.msra.mxu0 0.0
        %255 = vmatpush.msra.mxu0 0.0
        %256 = vmatpush.msra.mxu0 0.0
        %257 = vmatpush.msra.mxu0 %v233
        %258 = vmatpush.msra.mxu0 %v232
        %259 = vmatpush.msra.mxu0 %v231
        %260 = vmatpush.msra.mxu0 %v230
        %261 = vmatmul.f32.gmra.mxu0 %v240
        %v262 = vpop.f32.mrf.mxu0
        %v263 = vadd.f32 %v236, %v262
        %264 = vmatmul.f32.gmra.mxu0 %v243
        %v265 = vpop.f32.mrf.mxu0
        %v266 = vadd.f32 %v236, %v265
        %267 = vdwg.mxu0
        %vm268 = vcmask 523264
        %269 = vst.msk [vmem:[%s225] sm:$0xff] %vm268, %v263
        %270 = vst.msk [vmem:[%s225 + $0x8] sm:$0xff] %vm268, %v266
        %s271 = sand.u32 %s113, 1
        %s272 = scalar_lea.sflag [#allocation4], %s271
        %s273 = sand.u32 %s113, 1
        %s274 = smul.addr %s273, 16
        %s275 = scalar_lea.vmem [#allocation7], %s274
        // Predicated region
        $region41: #{tpu_custom_call.1} parent=31 // pred_check
          %p276 = pneg %p123
        $region42: #{tpu_custom_call.1} parent=31 // pred_check_branch
          %278 = sbr.rel (%p276) target = $region44
        $region43: #{tpu_custom_call.1} parent=31 // pred_region
          %s279 = smul.u32 2, %s26
          %281 = vsyncadd %s272, 0
          %s282 = smul.addr %s25, 2
          %s283 = sadd.s32 %s279, %s282
          %s284 = smul.addr %s283, 8
          %s285 = scalar_lea.hbm %s3, %s284
          %s286 = sshll.u32 %s275, 4
          %s287 = int_to_ptr.vmem [resolvable:$true] %s286
          %s288 = sshll.u32 %s285, 4
          %s289 = int_to_ptr.hbm [resolvable:$true] %s288
          %294 = dma.vmem_to_hbm [thread:$0]  %s287, 256, %s289, %s272, 128, 128, 8
        $region44: #{tpu_custom_call.1} parent=31 // pred_fallthru
          _
      $region32: #{tpu_custom_call.1} parent=5 // pred_fallthru
        _
      %p295 = scmp.le.s32.totalorder 2, %s16
      // Predicated region
      $region45: #{tpu_custom_call.1} parent=5 // pred_check
        %p296 = pneg %p295
      $region46: #{tpu_custom_call.1} parent=5 // pred_check_branch
        %298 = sbr.rel (%p296) target = $region48
      $region47: #{tpu_custom_call.1} parent=5 // pred_region
        %s299 = ssub.s32 %s16, 2
        // Predicated region
        $region49: #{tpu_custom_call.1} parent=47 // pred_check
          %p300 = pneg %p129
        $region50: #{tpu_custom_call.1} parent=47 // pred_check_branch
          %302 = sbr.rel (%p300) target = $region52
        $region51: #{tpu_custom_call.1} parent=47 // pred_region
          %s303 = sand.u32 %s114, 1
          %s304 = scalar_lea.sflag [#allocation4], %s303
          %s305 = sand.u32 %s114, 1
          %s306 = smul.addr %s305, 16
          %s307 = scalar_lea.vmem [#allocation7], %s306
          %309 = dma.done %s304, 256
        $region52: #{tpu_custom_call.1} parent=47 // pred_fallthru
          _
      $region48: #{tpu_custom_call.1} parent=5 // pred_fallthru
        _
    $region6: #{tpu_custom_call.1} parent=1 // loop_footer
      %s20 = sadd.s32 1, %s16
    $region7: #{tpu_custom_call.1} parent=1 // loop_footer_branch
      %15 = sbr.rel target = $region3
    $region8: #{tpu_custom_call.1} parent=1 // loop_exit
      _
    %310 = vsyncpa [#allocation3], 1
    %s311 = scalar_lea.sflag [#allocation3], 1
    %312 = vsyncpa %s311, 1
    %313 = vsyncpa [#allocation6], 1
    %314 = vsyncpa [#allocation4], 1
    %s315 = scalar_lea.sflag [#allocation4], 1
    %316 = vsyncpa %s315, 1

</llo_original>
